<compile_context>
chip_gen: v6e
topology: v6e:2x2x1
jax: 0.10.0
libtpu: 0.0.40
codegen_flags: <defaults>
</compile_context>

<pallas_src>
import functools

import jax
import jax.numpy as jnp
from jax.experimental import pallas as pl
from jax.experimental.pallas import tpu as pltpu

EPS = 1e-5
_VMEM_LIMIT = 32 * 1024 * 1024


def _round_up(n, m):
    return (n + m - 1) // m * m


def _stats_kernel(xl_ref, w1_ref, b1_ref, sum_ref, sumsq_ref, *, true_batch):
    """Pass 1: accumulate sum(h1) and sum(h1^2) over the whole batch (masked rows)."""
    i = pl.program_id(0)

    @pl.when(i == 0)
    def _():
        sum_ref[...] = jnp.zeros_like(sum_ref)
        sumsq_ref[...] = jnp.zeros_like(sumsq_ref)

    h = jnp.dot(xl_ref[...], w1_ref[...],
                preferred_element_type=jnp.float32) + b1_ref[...]

    # Mask rows that are batch padding so they don't contribute to the BN statistics.
    tile_m = h.shape[0]
    row = jax.lax.broadcasted_iota(jnp.int32, h.shape, 0) + i * tile_m
    valid = (row < true_batch).astype(jnp.float32)
    hv = h * valid

    sum_ref[...] += jnp.sum(hv, axis=0, keepdims=True)
    sumsq_ref[...] += jnp.sum(hv * h, axis=0, keepdims=True)  # valid * h^2


def _fwd_kernel(xl_ref, sum_ref, sumsq_ref, gamma_ref, beta_ref, *rest, inv_n):
    """Pass 2: layer 1 + BatchNorm (full-batch stats) + sigmoid + remaining MLP stack."""
    out_ref = rest[-1]
    wb = rest[:-1]  # (w1, b1, w2, b2, ..., wL, bL), weights bf16, biases f32

    # Layer 1 (recomputed; cheaper than round-tripping h1 through HBM).
    h = jnp.dot(xl_ref[...], wb[0][...],
                preferred_element_type=jnp.float32) + wb[1][...]

    # BatchNorm1d in training mode, folded to a single affine (scale, shift).
    mean = sum_ref[...] * inv_n
    var = jnp.maximum(sumsq_ref[...] * inv_n - mean * mean, 0.0)
    scale = gamma_ref[...] * jax.lax.rsqrt(var + EPS)
    shift = beta_ref[...] - mean * scale
    h = jax.nn.sigmoid(h * scale + shift)

    # Remaining Linear + Sigmoid layers (big hidden, down-proj, small hidden, head).
    for idx in range(2, len(wb), 2):
        w_ref, b_ref = wb[idx], wb[idx + 1]
        h = jax.nn.sigmoid(
            jnp.dot(h.astype(jnp.bfloat16), w_ref[...],
                    preferred_element_type=jnp.float32) + b_ref[...])

    out_ref[...] = h.astype(out_ref.dtype)


@jax.jit
def discriminator_forward(x, l, params):
    """x: [B, dx], l: [B, dl]; returns [B, 1] (f32)."""
    weights = params["weights"]  # list of [in, out] f32 (pre-transposed vs torch)
    biases = params["biases"]    # list of [1, out] f32
    gamma, beta = params["gamma"], params["beta"]

    B = x.shape[0]
    din = x.shape[1] + l.shape[1]

    # Lane-dense padded widths (multiples of 128) for every layer boundary.
    widths = [din] + [w.shape[1] for w in weights]
    pwidths = [_round_up(d, 128) for d in widths]
    in_p, big_p, out_p = pwidths[0], pwidths[1], pwidths[-1]

    # Batch tiling: rows padded to a multiple of the tile (tile is a multiple of 8).
    tm = min(256, _round_up(B, 8))
    pb = _round_up(B, tm)
    n_tiles = pb // tm

    # concat + zero-pad + bf16 cast (the cat(x, l) lives here, not in the kernel).
    xl = jnp.concatenate([x, l], axis=1).astype(jnp.float32)
    xl = jnp.pad(xl, ((0, pb - B), (0, in_p - din))).astype(jnp.bfloat16)

    def pad2(a, r, c, fill=0.0):
        return jnp.pad(a, ((0, r - a.shape[0]), (0, c - a.shape[1])),
                       constant_values=fill)

    pw = [pad2(w, pwidths[k], pwidths[k + 1]).astype(jnp.bfloat16)
          for k, w in enumerate(weights)]
    pbs = [pad2(b.reshape(1, -1), 1, pwidths[k + 1]).astype(jnp.float32)
           for k, b in enumerate(biases)]
    pgamma = pad2(gamma.reshape(1, -1), 1, big_p, fill=1.0).astype(jnp.float32)
    pbeta = pad2(beta.reshape(1, -1), 1, big_p).astype(jnp.float32)

    resident = lambda i: (0, 0)
    stream = lambda i: (i, 0)

    # ---- Pass 1: full-batch BN statistics (accumulator across an "arbitrary" axis) ----
    sum_h, sum_h2 = pl.pallas_call(
        functools.partial(_stats_kernel, true_batch=B),
        grid=(n_tiles,),
        in_specs=[
            pl.BlockSpec((tm, in_p), stream),
            pl.BlockSpec((in_p, big_p), resident),
            pl.BlockSpec((1, big_p), resident),
        ],
        out_specs=[
            pl.BlockSpec((1, big_p), resident),
            pl.BlockSpec((1, big_p), resident),
        ],
        out_shape=[
            jax.ShapeDtypeStruct((1, big_p), jnp.float32),
            jax.ShapeDtypeStruct((1, big_p), jnp.float32),
        ],
        compiler_params=pltpu.CompilerParams(
            dimension_semantics=("arbitrary",),
            vmem_limit_bytes=_VMEM_LIMIT),
    )(xl, pw[0], pbs[0])

    # ---- Pass 2: full forward, batch tiles independent ("parallel" -> 2 TCs on v7x) ----
    layer_args, layer_specs = [], []
    for k in range(len(pw)):
        layer_args += [pw[k], pbs[k]]
        layer_specs += [pl.BlockSpec((pwidths[k], pwidths[k + 1]), resident),
                        pl.BlockSpec((1, pwidths[k + 1]), resident)]

    out_padded = pl.pallas_call(
        functools.partial(_fwd_kernel, inv_n=1.0 / B),
        grid=(n_tiles,),
        in_specs=[
            pl.BlockSpec((tm, in_p), stream),
            pl.BlockSpec((1, big_p), resident),
            pl.BlockSpec((1, big_p), resident),
            pl.BlockSpec((1, big_p), resident),
            pl.BlockSpec((1, big_p), resident),
        ] + layer_specs,
        out_specs=pl.BlockSpec((tm, out_p), stream),
        out_shape=jax.ShapeDtypeStruct((pb, out_p), jnp.float32),
        compiler_params=pltpu.CompilerParams(
            dimension_semantics=("parallel",),
            vmem_limit_bytes=_VMEM_LIMIT),
    )(xl, sum_h, sum_h2, pgamma, pbeta, *layer_args)

    # Drop batch padding and the 127 zero-padded head columns.
    return out_padded[:B, :1]


def init_params(key, x_dim, l_dim, big_hidden_dim, small_hidden_dim,
                big_hidden_layers=2, small_hidden_layers=2):
    """Deterministic synthetic parameters. Weights are [in, out] (transposed vs torch)."""
    input_dim = x_dim + l_dim
    dims = [input_dim, big_hidden_dim]
    dims += [big_hidden_dim] * (big_hidden_layers - 1)
    dims += [small_hidden_dim]
    dims += [small_hidden_dim] * (small_hidden_layers - 1)
    dims += [1]

    keys = jax.random.split(key, len(dims) - 1)
    weights, biases = [], []
    for k, fi, fo in zip(keys, dims[:-1], dims[1:]):
        kw, kb = jax.random.split(k)
        bound = 1.0 / float(fi) ** 0.5
        weights.append(jax.random.uniform(kw, (fi, fo), jnp.float32, -bound, bound))
        biases.append(jax.random.uniform(kb, (1, fo), jnp.float32, -bound, bound))

    return {
        "weights": weights,
        "biases": biases,
        "gamma": jnp.ones((1, big_hidden_dim), jnp.float32),
        "beta": jnp.zeros((1, big_hidden_dim), jnp.float32),
    }


def reference_forward(x, l, params):
    """Pure-JAX f32 reference for sanity checking."""
    ws, bs = params["weights"], params["biases"]
    h = jnp.concatenate([x, l], axis=1)
    h = h @ ws[0] + bs[0]
    mean = jnp.mean(h, axis=0, keepdims=True)
    var = jnp.mean((h - mean) ** 2, axis=0, keepdims=True)
    h = (h - mean) / jnp.sqrt(var + EPS) * params["gamma"] + params["beta"]
    h = jax.nn.sigmoid(h)
    for w, b in zip(ws[1:], bs[1:]):
        h = jax.nn.sigmoid(h @ w + b)
    return h


if __name__ == "__main__":
    key = jax.random.PRNGKey(0)
    k_x, k_l, k_p = jax.random.split(key, 3)

    batch = 8
    x_dim, l_dim = 12, 20            # input_dim = 32
    big_hidden_dim = 64
    small_hidden_dim = 32

    x = jax.random.normal(k_x, (batch, x_dim), jnp.float32)
    l = jax.random.normal(k_l, (batch, l_dim), jnp.float32)
    params = init_params(k_p, x_dim, l_dim, big_hidden_dim, small_hidden_dim)

    out = jax.block_until_ready(discriminator_forward(x, l, params))
    ref = reference_forward(x, l, params)

    assert out.shape == (batch, 1), out.shape
    # bf16 MXU operands (f32 accumulation) -> looser tolerance than a pure-f32 kernel.
    assert jnp.allclose(out, ref, atol=2e-2, rtol=2e-2), (
        out, ref, float(jnp.max(jnp.abs(out - ref))))

    print("KERNEL_OK")
</pallas_src>

<mosaic_0001>
module attributes {stable_mosaic.version = 11 : i64} {
  func.func @_stats_kernel(%arg0: i32, %arg1: memref<8x128xbf16, #tpu.memory_space<vmem>>, %arg2: memref<128x128xbf16, #tpu.memory_space<vmem>>, %arg3: memref<1x128xf32, #tpu.memory_space<vmem>>, %arg4: memref<1x128xf32, #tpu.memory_space<vmem>>, %arg5: memref<1x128xf32, #tpu.memory_space<vmem>>) attributes {dimension_semantics = [#tpu.dimension_semantics<arbitrary>], iteration_bounds = array<i64: 1>, scalar_prefetch = 0 : i64, scratch_operands = 0 : i64, tpu.core_type = #tpu.core_type<tc>, window_params = [{transform_indices = @transform_0, window_bounds = array<i64: 8, 128>}, {pipeline_mode = #tpu.pipeline_mode<synchronous>, transform_indices = @transform_1, window_bounds = array<i64: 128, 128>}, {pipeline_mode = #tpu.pipeline_mode<synchronous>, transform_indices = @transform_2, window_bounds = array<i64: 1, 128>}, {pipeline_mode = #tpu.pipeline_mode<synchronous>, transform_indices = @transform_3, window_bounds = array<i64: 1, 128>}, {pipeline_mode = #tpu.pipeline_mode<synchronous>, transform_indices = @transform_4, window_bounds = array<i64: 1, 128>}]} {
    %c0_i32 = arith.constant 0 : i32
    %0 = arith.cmpi eq, %arg0, %c0_i32 : i32
    %1 = arith.extui %0 : i1 to i32
    %c0_i32_0 = arith.constant 0 : i32
    %2 = arith.cmpi ne, %1, %c0_i32_0 : i32
    scf.if %2 {
      %cst_17 = arith.constant 0.000000e+00 : f32
      %29 = vector.broadcast %cst_17 : f32 to vector<1x128xf32>
      %c0_18 = arith.constant 0 : index
      %c0_19 = arith.constant 0 : index
      %30 = vector.load %arg4[%c0_18, %c0_19] : memref<1x128xf32, #tpu.memory_space<vmem>>, vector<1x128xf32>
      tpu.vector_store %arg4[%c0_18, %c0_19], %29 {strides = array<i32>} : memref<1x128xf32, #tpu.memory_space<vmem>>, vector<1x128xf32>,
      %cst_20 = arith.constant 0.000000e+00 : f32
      %31 = vector.broadcast %cst_20 : f32 to vector<1x128xf32>
      %c0_21 = arith.constant 0 : index
      %c0_22 = arith.constant 0 : index
      %32 = vector.load %arg5[%c0_21, %c0_22] : memref<1x128xf32, #tpu.memory_space<vmem>>, vector<1x128xf32>
      tpu.vector_store %arg5[%c0_21, %c0_22], %31 {strides = array<i32>} : memref<1x128xf32, #tpu.memory_space<vmem>>, vector<1x128xf32>,
    } else {
    }
    %c0 = arith.constant 0 : index
    %c0_1 = arith.constant 0 : index
    %3 = vector.load %arg1[%c0, %c0_1] : memref<8x128xbf16, #tpu.memory_space<vmem>>, vector<8x128xbf16>
    %c0_2 = arith.constant 0 : index
    %c0_3 = arith.constant 0 : index
    %4 = vector.load %arg2[%c0_2, %c0_3] : memref<128x128xbf16, #tpu.memory_space<vmem>>, vector<128x128xbf16>
    %cst = arith.constant dense<0.000000e+00> : vector<8x128xf32>
    %5 = tpu.matmul %3, %4, %cst {dimension_numbers = #tpu.dot_dimension_numbers<[1], [0], [0], [1], [0, 0, 1, 1], [], []>} : vector<8x128xbf16>, vector<128x128xbf16>, vector<8x128xf32> -> vector<8x128xf32>
    %c0_4 = arith.constant 0 : index
    %c0_5 = arith.constant 0 : index
    %6 = vector.load %arg3[%c0_4, %c0_5] : memref<1x128xf32, #tpu.memory_space<vmem>>, vector<1x128xf32>
    %7 = vector.broadcast %6 : vector<1x128xf32> to vector<8x128xf32>
    %8 = arith.addf %5, %7 : vector<8x128xf32>
    %9 = tpu.iota {dimensions = array<i32: 0>} : vector<8x128xi32>
    %c8_i32 = arith.constant 8 : i32
    %10 = arith.muli %arg0, %c8_i32 : i32
    %11 = vector.broadcast %10 : i32 to vector<8x128xi32>
    %12 = arith.addi %9, %11 : vector<8x128xi32>
    %c8_i32_6 = arith.constant 8 : i32
    %13 = vector.broadcast %c8_i32_6 : i32 to vector<8x128xi32>
    %14 = arith.cmpi slt, %12, %13 : vector<8x128xi32>
    %15 = arith.extui %14 : vector<8x128xi1> to vector<8x128xi32>
    %16 = arith.sitofp %15 : vector<8x128xi32> to vector<8x128xf32>
    %17 = arith.mulf %8, %16 : vector<8x128xf32>
    %c0_7 = arith.constant 0 : index
    %c0_8 = arith.constant 0 : index
    %18 = vector.load %arg4[%c0_7, %c0_8] : memref<1x128xf32, #tpu.memory_space<vmem>>, vector<1x128xf32>
    %cst_9 = arith.constant dense<0.000000e+00> : vector<128xf32>
    %19 = vector.multi_reduction <add>, %17, %cst_9 [0] : vector<8x128xf32> to vector<128xf32>
    %20 = vector.shape_cast %19 : vector<128xf32> to vector<1x128xf32>
    %21 = arith.addf %18, %20 : vector<1x128xf32>
    %c0_10 = arith.constant 0 : index
    %c0_11 = arith.constant 0 : index
    %22 = vector.load %arg4[%c0_10, %c0_11] : memref<1x128xf32, #tpu.memory_space<vmem>>, vector<1x128xf32>
    tpu.vector_store %arg4[%c0_10, %c0_11], %21 {strides = array<i32>} : memref<1x128xf32, #tpu.memory_space<vmem>>, vector<1x128xf32>,
    %c0_12 = arith.constant 0 : index
    %c0_13 = arith.constant 0 : index
    %23 = vector.load %arg5[%c0_12, %c0_13] : memref<1x128xf32, #tpu.memory_space<vmem>>, vector<1x128xf32>
    %24 = arith.mulf %17, %8 : vector<8x128xf32>
    %cst_14 = arith.constant dense<0.000000e+00> : vector<128xf32>
    %25 = vector.multi_reduction <add>, %24, %cst_14 [0] : vector<8x128xf32> to vector<128xf32>
    %26 = vector.shape_cast %25 : vector<128xf32> to vector<1x128xf32>
    %27 = arith.addf %23, %26 : vector<1x128xf32>
    %c0_15 = arith.constant 0 : index
    %c0_16 = arith.constant 0 : index
    %28 = vector.load %arg5[%c0_15, %c0_16] : memref<1x128xf32, #tpu.memory_space<vmem>>, vector<1x128xf32>
    tpu.vector_store %arg5[%c0_15, %c0_16], %27 {strides = array<i32>} : memref<1x128xf32, #tpu.memory_space<vmem>>, vector<1x128xf32>,
    return
  }
  func.func @transform_0(%arg0: i32) -> (i32, i32) {
    %c0_i32 = arith.constant 0 : i32
    %c0_i32_0 = arith.constant 0 : i32
    return %arg0, %c0_i32 : i32, i32
  }
  func.func @transform_1(%arg0: i32) -> (i32, i32) {
    %c0_i32 = arith.constant 0 : i32
    %c0_i32_0 = arith.constant 0 : i32
    %c0_i32_1 = arith.constant 0 : i32
    return %c0_i32, %c0_i32_0 : i32, i32
  }
  func.func @transform_2(%arg0: i32) -> (i32, i32) {
    %c0_i32 = arith.constant 0 : i32
    %c0_i32_0 = arith.constant 0 : i32
    %c0_i32_1 = arith.constant 0 : i32
    return %c0_i32, %c0_i32_0 : i32, i32
  }
  func.func @transform_3(%arg0: i32) -> (i32, i32) {
    %c0_i32 = arith.constant 0 : i32
    %c0_i32_0 = arith.constant 0 : i32
    %c0_i32_1 = arith.constant 0 : i32
    return %c0_i32, %c0_i32_0 : i32, i32
  }
  func.func @transform_4(%arg0: i32) -> (i32, i32) {
    %c0_i32 = arith.constant 0 : i32
    %c0_i32_0 = arith.constant 0 : i32
    %c0_i32_1 = arith.constant 0 : i32
    return %c0_i32, %c0_i32_0 : i32, i32
  }
}

module attributes {stable_mosaic.version = 11 : i64} {
  func.func @_fwd_kernel(%arg0: i32, %arg1: memref<8x128xbf16, #tpu.memory_space<vmem>>, %arg2: memref<1x128xf32, #tpu.memory_space<vmem>>, %arg3: memref<1x128xf32, #tpu.memory_space<vmem>>, %arg4: memref<1x128xf32, #tpu.memory_space<vmem>>, %arg5: memref<1x128xf32, #tpu.memory_space<vmem>>, %arg6: memref<128x128xbf16, #tpu.memory_space<vmem>>, %arg7: memref<1x128xf32, #tpu.memory_space<vmem>>, %arg8: memref<128x128xbf16, #tpu.memory_space<vmem>>, %arg9: memref<1x128xf32, #tpu.memory_space<vmem>>, %arg10: memref<128x128xbf16, #tpu.memory_space<vmem>>, %arg11: memref<1x128xf32, #tpu.memory_space<vmem>>, %arg12: memref<128x128xbf16, #tpu.memory_space<vmem>>, %arg13: memref<1x128xf32, #tpu.memory_space<vmem>>, %arg14: memref<128x128xbf16, #tpu.memory_space<vmem>>, %arg15: memref<1x128xf32, #tpu.memory_space<vmem>>, %arg16: memref<8x128xf32, #tpu.memory_space<vmem>>) attributes {dimension_semantics = [#tpu.dimension_semantics<parallel>], iteration_bounds = array<i64: 1>, scalar_prefetch = 0 : i64, scratch_operands = 0 : i64, tpu.core_type = #tpu.core_type<tc>, window_params = [{transform_indices = @transform_0, window_bounds = array<i64: 8, 128>}, {pipeline_mode = #tpu.pipeline_mode<synchronous>, transform_indices = @transform_1, window_bounds = array<i64: 1, 128>}, {pipeline_mode = #tpu.pipeline_mode<synchronous>, transform_indices = @transform_2, window_bounds = array<i64: 1, 128>}, {pipeline_mode = #tpu.pipeline_mode<synchronous>, transform_indices = @transform_3, window_bounds = array<i64: 1, 128>}, {pipeline_mode = #tpu.pipeline_mode<synchronous>, transform_indices = @transform_4, window_bounds = array<i64: 1, 128>}, {pipeline_mode = #tpu.pipeline_mode<synchronous>, transform_indices = @transform_5, window_bounds = array<i64: 128, 128>}, {pipeline_mode = #tpu.pipeline_mode<synchronous>, transform_indices = @transform_6, window_bounds = array<i64: 1, 128>}, {pipeline_mode = #tpu.pipeline_mode<synchronous>, transform_indices = @transform_7, window_bounds = array<i64: 128, 128>}, {pipeline_mode = #tpu.pipeline_mode<synchronous>, transform_indices = @transform_8, window_bounds = array<i64: 1, 128>}, {pipeline_mode = #tpu.pipeline_mode<synchronous>, transform_indices = @transform_9, window_bounds = array<i64: 128, 128>}, {pipeline_mode = #tpu.pipeline_mode<synchronous>, transform_indices = @transform_10, window_bounds = array<i64: 1, 128>}, {pipeline_mode = #tpu.pipeline_mode<synchronous>, transform_indices = @transform_11, window_bounds = array<i64: 128, 128>}, {pipeline_mode = #tpu.pipeline_mode<synchronous>, transform_indices = @transform_12, window_bounds = array<i64: 1, 128>}, {pipeline_mode = #tpu.pipeline_mode<synchronous>, transform_indices = @transform_13, window_bounds = array<i64: 128, 128>}, {pipeline_mode = #tpu.pipeline_mode<synchronous>, transform_indices = @transform_14, window_bounds = array<i64: 1, 128>}, {transform_indices = @transform_15, window_bounds = array<i64: 8, 128>}]} {
    %c0 = arith.constant 0 : index
    %c0_0 = arith.constant 0 : index
    %0 = vector.load %arg1[%c0, %c0_0] : memref<8x128xbf16, #tpu.memory_space<vmem>>, vector<8x128xbf16>
    %c0_1 = arith.constant 0 : index
    %c0_2 = arith.constant 0 : index
    %1 = vector.load %arg6[%c0_1, %c0_2] : memref<128x128xbf16, #tpu.memory_space<vmem>>, vector<128x128xbf16>
    %cst = arith.constant dense<0.000000e+00> : vector<8x128xf32>
    %2 = tpu.matmul %0, %1, %cst {dimension_numbers = #tpu.dot_dimension_numbers<[1], [0], [0], [1], [0, 0, 1, 1], [], []>} : vector<8x128xbf16>, vector<128x128xbf16>, vector<8x128xf32> -> vector<8x128xf32>
    %c0_3 = arith.constant 0 : index
    %c0_4 = arith.constant 0 : index
    %3 = vector.load %arg7[%c0_3, %c0_4] : memref<1x128xf32, #tpu.memory_space<vmem>>, vector<1x128xf32>
    %4 = vector.broadcast %3 : vector<1x128xf32> to vector<8x128xf32>
    %5 = arith.addf %2, %4 : vector<8x128xf32>
    %c0_5 = arith.constant 0 : index
    %c0_6 = arith.constant 0 : index
    %6 = vector.load %arg2[%c0_5, %c0_6] : memref<1x128xf32, #tpu.memory_space<vmem>>, vector<1x128xf32>
    %cst_7 = arith.constant 1.250000e-01 : f32
    %7 = vector.broadcast %cst_7 : f32 to vector<1x128xf32>
    %8 = arith.mulf %6, %7 : vector<1x128xf32>
    %c0_8 = arith.constant 0 : index
    %c0_9 = arith.constant 0 : index
    %9 = vector.load %arg3[%c0_8, %c0_9] : memref<1x128xf32, #tpu.memory_space<vmem>>, vector<1x128xf32>
    %cst_10 = arith.constant 1.250000e-01 : f32
    %10 = vector.broadcast %cst_10 : f32 to vector<1x128xf32>
    %11 = arith.mulf %9, %10 : vector<1x128xf32>
    %12 = arith.mulf %8, %8 : vector<1x128xf32>
    %13 = arith.subf %11, %12 : vector<1x128xf32>
    %cst_11 = arith.constant 0.000000e+00 : f32
    %14 = vector.broadcast %cst_11 : f32 to vector<1x128xf32>
    %15 = arith.maximumf %13, %14 : vector<1x128xf32>
    %c0_12 = arith.constant 0 : index
    %c0_13 = arith.constant 0 : index
    %16 = vector.load %arg4[%c0_12, %c0_13] : memref<1x128xf32, #tpu.memory_space<vmem>>, vector<1x128xf32>
    %cst_14 = arith.constant 9.99999974E-6 : f32
    %17 = vector.broadcast %cst_14 : f32 to vector<1x128xf32>
    %18 = arith.addf %15, %17 : vector<1x128xf32>
    %19 = math.rsqrt %18 : vector<1x128xf32>
    %20 = arith.mulf %16, %19 : vector<1x128xf32>
    %c0_15 = arith.constant 0 : index
    %c0_16 = arith.constant 0 : index
    %21 = vector.load %arg5[%c0_15, %c0_16] : memref<1x128xf32, #tpu.memory_space<vmem>>, vector<1x128xf32>
    %22 = arith.mulf %8, %20 : vector<1x128xf32>
    %23 = arith.subf %21, %22 : vector<1x128xf32>
    %24 = vector.broadcast %20 : vector<1x128xf32> to vector<8x128xf32>
    %25 = arith.mulf %5, %24 : vector<8x128xf32>
    %26 = vector.broadcast %23 : vector<1x128xf32> to vector<8x128xf32>
    %27 = arith.addf %25, %26 : vector<8x128xf32>
    %28 = arith.negf %27 : vector<8x128xf32>
    %29 = math.exp %28 : vector<8x128xf32>
    %cst_17 = arith.constant 1.000000e+00 : f32
    %30 = vector.broadcast %cst_17 : f32 to vector<8x128xf32>
    %31 = arith.addf %30, %29 : vector<8x128xf32>
    %32 = arith.divf %30, %31 : vector<8x128xf32>
    %33 = arith.truncf %32 : vector<8x128xf32> to vector<8x128xbf16>
    %c0_18 = arith.constant 0 : index
    %c0_19 = arith.constant 0 : index
    %34 = vector.load %arg8[%c0_18, %c0_19] : memref<128x128xbf16, #tpu.memory_space<vmem>>, vector<128x128xbf16>
    %cst_20 = arith.constant dense<0.000000e+00> : vector<8x128xf32>
    %35 = tpu.matmul %33, %34, %cst_20 {dimension_numbers = #tpu.dot_dimension_numbers<[1], [0], [0], [1], [0, 0, 1, 1], [], []>} : vector<8x128xbf16>, vector<128x128xbf16>, vector<8x128xf32> -> vector<8x128xf32>
    %c0_21 = arith.constant 0 : index
    %c0_22 = arith.constant 0 : index
    %36 = vector.load %arg9[%c0_21, %c0_22] : memref<1x128xf32, #tpu.memory_space<vmem>>, vector<1x128xf32>
    %37 = vector.broadcast %36 : vector<1x128xf32> to vector<8x128xf32>
    %38 = arith.addf %35, %37 : vector<8x128xf32>
    %39 = arith.negf %38 : vector<8x128xf32>
    %40 = math.exp %39 : vector<8x128xf32>
    %cst_23 = arith.constant 1.000000e+00 : f32
    %41 = vector.broadcast %cst_23 : f32 to vector<8x128xf32>
    %42 = arith.addf %41, %40 : vector<8x128xf32>
    %43 = arith.divf %41, %42 : vector<8x128xf32>
    %44 = arith.truncf %43 : vector<8x128xf32> to vector<8x128xbf16>
    %c0_24 = arith.constant 0 : index
    %c0_25 = arith.constant 0 : index
    %45 = vector.load %arg10[%c0_24, %c0_25] : memref<128x128xbf16, #tpu.memory_space<vmem>>, vector<128x128xbf16>
    %cst_26 = arith.constant dense<0.000000e+00> : vector<8x128xf32>
    %46 = tpu.matmul %44, %45, %cst_26 {dimension_numbers = #tpu.dot_dimension_numbers<[1], [0], [0], [1], [0, 0, 1, 1], [], []>} : vector<8x128xbf16>, vector<128x128xbf16>, vector<8x128xf32> -> vector<8x128xf32>
    %c0_27 = arith.constant 0 : index
    %c0_28 = arith.constant 0 : index
    %47 = vector.load %arg11[%c0_27, %c0_28] : memref<1x128xf32, #tpu.memory_space<vmem>>, vector<1x128xf32>
    %48 = vector.broadcast %47 : vector<1x128xf32> to vector<8x128xf32>
    %49 = arith.addf %46, %48 : vector<8x128xf32>
    %50 = arith.negf %49 : vector<8x128xf32>
    %51 = math.exp %50 : vector<8x128xf32>
    %cst_29 = arith.constant 1.000000e+00 : f32
    %52 = vector.broadcast %cst_29 : f32 to vector<8x128xf32>
    %53 = arith.addf %52, %51 : vector<8x128xf32>
    %54 = arith.divf %52, %53 : vector<8x128xf32>
    %55 = arith.truncf %54 : vector<8x128xf32> to vector<8x128xbf16>
    %c0_30 = arith.constant 0 : index
    %c0_31 = arith.constant 0 : index
    %56 = vector.load %arg12[%c0_30, %c0_31] : memref<128x128xbf16, #tpu.memory_space<vmem>>, vector<128x128xbf16>
    %cst_32 = arith.constant dense<0.000000e+00> : vector<8x128xf32>
    %57 = tpu.matmul %55, %56, %cst_32 {dimension_numbers = #tpu.dot_dimension_numbers<[1], [0], [0], [1], [0, 0, 1, 1], [], []>} : vector<8x128xbf16>, vector<128x128xbf16>, vector<8x128xf32> -> vector<8x128xf32>
    %c0_33 = arith.constant 0 : index
    %c0_34 = arith.constant 0 : index
    %58 = vector.load %arg13[%c0_33, %c0_34] : memref<1x128xf32, #tpu.memory_space<vmem>>, vector<1x128xf32>
    %59 = vector.broadcast %58 : vector<1x128xf32> to vector<8x128xf32>
    %60 = arith.addf %57, %59 : vector<8x128xf32>
    %61 = arith.negf %60 : vector<8x128xf32>
    %62 = math.exp %61 : vector<8x128xf32>
    %cst_35 = arith.constant 1.000000e+00 : f32
    %63 = vector.broadcast %cst_35 : f32 to vector<8x128xf32>
    %64 = arith.addf %63, %62 : vector<8x128xf32>
    %65 = arith.divf %63, %64 : vector<8x128xf32>
    %66 = arith.truncf %65 : vector<8x128xf32> to vector<8x128xbf16>
    %c0_36 = arith.constant 0 : index
    %c0_37 = arith.constant 0 : index
    %67 = vector.load %arg14[%c0_36, %c0_37] : memref<128x128xbf16, #tpu.memory_space<vmem>>, vector<128x128xbf16>
    %cst_38 = arith.constant dense<0.000000e+00> : vector<8x128xf32>
    %68 = tpu.matmul %66, %67, %cst_38 {dimension_numbers = #tpu.dot_dimension_numbers<[1], [0], [0], [1], [0, 0, 1, 1], [], []>} : vector<8x128xbf16>, vector<128x128xbf16>, vector<8x128xf32> -> vector<8x128xf32>
    %c0_39 = arith.constant 0 : index
    %c0_40 = arith.constant 0 : index
    %69 = vector.load %arg15[%c0_39, %c0_40] : memref<1x128xf32, #tpu.memory_space<vmem>>, vector<1x128xf32>
    %70 = vector.broadcast %69 : vector<1x128xf32> to vector<8x128xf32>
    %71 = arith.addf %68, %70 : vector<8x128xf32>
    %72 = arith.negf %71 : vector<8x128xf32>
    %73 = math.exp %72 : vector<8x128xf32>
    %cst_41 = arith.constant 1.000000e+00 : f32
    %74 = vector.broadcast %cst_41 : f32 to vector<8x128xf32>
    %75 = arith.addf %74, %73 : vector<8x128xf32>
    %76 = arith.divf %74, %75 : vector<8x128xf32>
    %c0_42 = arith.constant 0 : index
    %c0_43 = arith.constant 0 : index
    %77 = vector.load %arg16[%c0_42, %c0_43] : memref<8x128xf32, #tpu.memory_space<vmem>>, vector<8x128xf32>
    tpu.vector_store %arg16[%c0_42, %c0_43], %76 {strides = array<i32>} : memref<8x128xf32, #tpu.memory_space<vmem>>, vector<8x128xf32>,
    return
  }
  func.func @transform_0(%arg0: i32) -> (i32, i32) {
    %c0_i32 = arith.constant 0 : i32
    %c0_i32_0 = arith.constant 0 : i32
    return %arg0, %c0_i32 : i32, i32
  }
  func.func @transform_1(%arg0: i32) -> (i32, i32) {
    %c0_i32 = arith.constant 0 : i32
    %c0_i32_0 = arith.constant 0 : i32
    %c0_i32_1 = arith.constant 0 : i32
    return %c0_i32, %c0_i32_0 : i32, i32
  }
  func.func @transform_2(%arg0: i32) -> (i32, i32) {
    %c0_i32 = arith.constant 0 : i32
    %c0_i32_0 = arith.constant 0 : i32
    %c0_i32_1 = arith.constant 0 : i32
    return %c0_i32, %c0_i32_0 : i32, i32
  }
  func.func @transform_3(%arg0: i32) -> (i32, i32) {
    %c0_i32 = arith.constant 0 : i32
    %c0_i32_0 = arith.constant 0 : i32
    %c0_i32_1 = arith.constant 0 : i32
    return %c0_i32, %c0_i32_0 : i32, i32
  }
  func.func @transform_4(%arg0: i32) -> (i32, i32) {
    %c0_i32 = arith.constant 0 : i32
    %c0_i32_0 = arith.constant 0 : i32
    %c0_i32_1 = arith.constant 0 : i32
    return %c0_i32, %c0_i32_0 : i32, i32
  }
  func.func @transform_5(%arg0: i32) -> (i32, i32) {
    %c0_i32 = arith.constant 0 : i32
    %c0_i32_0 = arith.constant 0 : i32
    %c0_i32_1 = arith.constant 0 : i32
    return %c0_i32, %c0_i32_0 : i32, i32
  }
  func.func @transform_6(%arg0: i32) -> (i32, i32) {
    %c0_i32 = arith.constant 0 : i32
    %c0_i32_0 = arith.constant 0 : i32
    %c0_i32_1 = arith.constant 0 : i32
    return %c0_i32, %c0_i32_0 : i32, i32
  }
  func.func @transform_7(%arg0: i32) -> (i32, i32) {
    %c0_i32 = arith.constant 0 : i32
    %c0_i32_0 = arith.constant 0 : i32
    %c0_i32_1 = arith.constant 0 : i32
    return %c0_i32, %c0_i32_0 : i32, i32
  }
  func.func @transform_8(%arg0: i32) -> (i32, i32) {
    %c0_i32 = arith.constant 0 : i32
    %c0_i32_0 = arith.constant 0 : i32
    %c0_i32_1 = arith.constant 0 : i32
    return %c0_i32, %c0_i32_0 : i32, i32
  }
  func.func @transform_9(%arg0: i32) -> (i32, i32) {
    %c0_i32 = arith.constant 0 : i32
    %c0_i32_0 = arith.constant 0 : i32
    %c0_i32_1 = arith.constant 0 : i32
    return %c0_i32, %c0_i32_0 : i32, i32
  }
  func.func @transform_10(%arg0: i32) -> (i32, i32) {
    %c0_i32 = arith.constant 0 : i32
    %c0_i32_0 = arith.constant 0 : i32
    %c0_i32_1 = arith.constant 0 : i32
    return %c0_i32, %c0_i32_0 : i32, i32
  }
  func.func @transform_11(%arg0: i32) -> (i32, i32) {
    %c0_i32 = arith.constant 0 : i32
    %c0_i32_0 = arith.constant 0 : i32
    %c0_i32_1 = arith.constant 0 : i32
    return %c0_i32, %c0_i32_0 : i32, i32
  }
  func.func @transform_12(%arg0: i32) -> (i32, i32) {
    %c0_i32 = arith.constant 0 : i32
    %c0_i32_0 = arith.constant 0 : i32
    %c0_i32_1 = arith.constant 0 : i32
    return %c0_i32, %c0_i32_0 : i32, i32
  }
  func.func @transform_13(%arg0: i32) -> (i32, i32) {
    %c0_i32 = arith.constant 0 : i32
    %c0_i32_0 = arith.constant 0 : i32
    %c0_i32_1 = arith.constant 0 : i32
    return %c0_i32, %c0_i32_0 : i32, i32
  }
  func.func @transform_14(%arg0: i32) -> (i32, i32) {
    %c0_i32 = arith.constant 0 : i32
    %c0_i32_0 = arith.constant 0 : i32
    %c0_i32_1 = arith.constant 0 : i32
    return %c0_i32, %c0_i32_0 : i32, i32
  }
  func.func @transform_15(%arg0: i32) -> (i32, i32) {
    %c0_i32 = arith.constant 0 : i32
    %c0_i32_0 = arith.constant 0 : i32
    return %arg0, %c0_i32 : i32, i32
  }
}

</mosaic_0001>

<llo_original>
// kernel: discriminator_forward.2
$region0: #{discriminator_forward.2}
  #allocation0 [shape = 'u32[]', space=smem, size = 0x4, offset = 0x4, fixed_abs, tag = 'smem constant byte address 0x4 - core index']
  #allocation1 [shape = 'u32[144,128]{1,0:T(1,128)}', space=vmem, size = 0x12000, scoped, tag = 'internal scratch']
  %s0 = inlined_call_operand.vmem [shape: bf16[8,128], index: 0, kind: input, shape index: {}]
  %s1 = inlined_call_operand.vmem [shape: bf16[128,128], index: 1, kind: input, shape index: {}]
  %s2 = inlined_call_operand.vmem [shape: f32[1,128], index: 2, kind: input, shape index: {}]
  %s3 = inlined_call_operand.vmem [shape: f32[1,128], index: 3, kind: output, shape index: {0}]
  %s4 = inlined_call_operand.vmem [shape: f32[1,128], index: 4, kind: output, shape index: {1}]
  %5 = xla_tuple %s3, %s4
  %s6 = sld [smem:[#allocation0]]
  $region34: #{discriminator_forward.2} parent=0
    _
  %s8 = ssub.s32 1, %s6
  %s9 = scalar_select 0, %s8, %s6
  // Predicated region
  $region2: #{discriminator_forward.2} parent=0 // pred_check
    _
  $region3: #{discriminator_forward.2} parent=0 // pred_check_branch
    %11 = sbr.rel (0) target = $region5
  $region4: #{discriminator_forward.2} parent=0 // pred_region
    _
  $region5: #{discriminator_forward.2} parent=0 // pred_fallthru
    _
  // Predicated region
  $region6: #{discriminator_forward.2} parent=0 // pred_check
    _
  $region7: #{discriminator_forward.2} parent=0 // pred_check_branch
    %13 = sbr.rel (0) target = $region9
  $region8: #{discriminator_forward.2} parent=0 // pred_region
    _
  $region9: #{discriminator_forward.2} parent=0 // pred_fallthru
    _
  // Predicated region
  $region10: #{discriminator_forward.2} parent=0 // pred_check
    _
  $region11: #{discriminator_forward.2} parent=0 // pred_check_branch
    %15 = sbr.rel (0) target = $region13
  $region12: #{discriminator_forward.2} parent=0 // pred_region
    _
  $region13: #{discriminator_forward.2} parent=0 // pred_fallthru
    _
  %p17 = scmp.eq.s32.totalorder 0, 0
  // Predicated region
  $region14: #{discriminator_forward.2} parent=0 // pred_check
    %p18 = pneg %p17
  $region15: #{discriminator_forward.2} parent=0 // pred_check_branch
    %20 = sbr.rel (%p18) target = $region17
  $region16: #{discriminator_forward.2} parent=0 // pred_region
    %21 = vst [vmem:[%s3] sm:$0x1] 0.0
    %22 = vst [vmem:[%s4] sm:$0x1] 0.0
  $region17: #{discriminator_forward.2} parent=0 // pred_fallthru
    _
  %v23 = vld [vmem:[%s0] sm:$0xf]
  %v24 = vld [vmem:[%s1] sm:$0xf]
  %v25 = vld [vmem:[%s1 + $0x4] sm:$0xf]
  %v26 = vld [vmem:[%s1 + $0x8] sm:$0xf]
  %v27 = vld [vmem:[%s1 + $0xc] sm:$0xf]
  %v28 = vld [vmem:[%s1 + $0x10] sm:$0xf]
  %v29 = vld [vmem:[%s1 + $0x14] sm:$0xf]
  %v30 = vld [vmem:[%s1 + $0x18] sm:$0xf]
  %v31 = vld [vmem:[%s1 + $0x1c] sm:$0xf]
  %v32 = vld [vmem:[%s1 + $0x20] sm:$0xf]
  %v33 = vld [vmem:[%s1 + $0x24] sm:$0xf]
  %v34 = vld [vmem:[%s1 + $0x28] sm:$0xf]
  %v35 = vld [vmem:[%s1 + $0x2c] sm:$0xf]
  %v36 = vld [vmem:[%s1 + $0x30] sm:$0xf]
  %v37 = vld [vmem:[%s1 + $0x34] sm:$0xf]
  %v38 = vld [vmem:[%s1 + $0x38] sm:$0xf]
  %v39 = vld [vmem:[%s1 + $0x3c] sm:$0xf]
  %v40 = vld [vmem:[%s2] sm:$0x1]
  %v42 = vlaneseq
  %v43 = vshrl.u32 %v42, 7
  %v44 = vsub.s32 0, %v43
  %v45 = vrot.slane %v40, %v44
  %v63 = vunpack.c.l.b16 %v24
  %v64 = vunpack.c.l.b16 %v25
  %v65 = vunpack.c.l.b16 %v26
  %v66 = vunpack.c.l.b16 %v27
  %v67 = vunpack.c.l.b16 %v28
  %v68 = vunpack.c.l.b16 %v29
  %v69 = vunpack.c.l.b16 %v30
  %v70 = vunpack.c.l.b16 %v31
  %v71 = vunpack.c.l.b16 %v32
  %v72 = vunpack.c.l.b16 %v33
  %v73 = vunpack.c.l.b16 %v34
  %v74 = vunpack.c.l.b16 %v35
  %v75 = vunpack.c.l.b16 %v36
  %v76 = vunpack.c.l.b16 %v37
  %v77 = vunpack.c.l.b16 %v38
  %v78 = vunpack.c.l.b16 %v39
  %v79 = vpack.c.b16 %v64, %v63
  %v80 = vpack.c.b16 %v66, %v65
  %v81 = vpack.c.b16 %v68, %v67
  %v82 = vpack.c.b16 %v70, %v69
  %v83 = vpack.c.b16 %v72, %v71
  %v84 = vpack.c.b16 %v74, %v73
  %v85 = vpack.c.b16 %v76, %v75
  %v86 = vpack.c.b16 %v78, %v77
  %95 = vmatprep.subr.bf16.mxu0 0
  %96 = vmatpush1.bf16.msra.mxu0 %v86
  %97 = vmatprep.subr.bf16.mxu0 0
  %98 = vmatpush1.bf16.msra.mxu0 %v85
  %99 = vmatprep.subr.bf16.mxu0 0
  %100 = vmatpush1.bf16.msra.mxu0 %v84
  %101 = vmatprep.subr.bf16.mxu0 0
  %102 = vmatpush1.bf16.msra.mxu0 %v83
  %103 = vmatprep.subr.bf16.mxu0 0
  %104 = vmatpush1.bf16.msra.mxu0 %v82
  %105 = vmatprep.subr.bf16.mxu0 0
  %106 = vmatpush1.bf16.msra.mxu0 %v81
  %107 = vmatprep.subr.bf16.mxu0 0
  %108 = vmatpush1.bf16.msra.mxu0 %v80
  %109 = vmatprep.subr.bf16.mxu0 0
  %110 = vmatpush1.bf16.msra.mxu0 %v79
  %111 = vmatprep.subr.bf16.mxu0 0
  %112 = vmatpush2.bf16.msra.mxu0 0
  %113 = vmatprep.subr.bf16.mxu0 0
  %114 = vmatpush2.bf16.msra.mxu0 0
  %115 = vmatprep.subr.bf16.mxu0 0
  %116 = vmatpush2.bf16.msra.mxu0 0
  %117 = vmatprep.subr.bf16.mxu0 0
  %118 = vmatpush2.bf16.msra.mxu0 0
  %119 = vmatprep.subr.bf16.mxu0 0
  %120 = vmatpush2.bf16.msra.mxu0 0
  %121 = vmatprep.subr.bf16.mxu0 0
  %122 = vmatpush2.bf16.msra.mxu0 0
  %123 = vmatprep.subr.bf16.mxu0 0
  %124 = vmatpush2.bf16.msra.mxu0 0
  %125 = vmatprep.subr.bf16.mxu0 0
  %126 = vmatpush2.bf16.msra.mxu0 0
  %127 = vmatprep.mubr.bf16.mxu0 0
  %128 = vmatmul.mubr.bf16.gmra.mxu0 %v23
  %v129 = vpop.f32.mrf.mxu0
  %v130 = vadd.f32 %v45, %v129
  %v131 = vpop.f32.mrf.mxu0
  %v132 = vpop.f32.mrf.mxu0
  %v133 = vpop.f32.mrf.mxu0
  %134 = vdwg.mxu0
  %v135 = vlaneseq
  %v136 = vshrl.u32 %v135, 7
  %s137 = smul.u32 0, 8
  %v138 = vstv %s137
  %v139 = vadd.s32 %v136, %v138
  %vm140 = vcmp.lt.s32.totalorder %v139, 8
  %v141 = vsel %vm140, 1, 0
  %v142 = vcvt.s32.f32 %v141
  %v143 = vmul.f32 %v130, %v142
  %v144 = vld [vmem:[%s3] sm:$0x1]
  %v145 = vrot.slane %v143, 4
  %v146 = vadd.f32 %v143, %v145
  %v147 = vrot.slane %v146, 2
  %v148 = vadd.f32 %v146, %v147
  %v149 = vrot.slane %v148, 1
  %v150 = vadd.f32 %v148, %v149
  %v151 = vadd.f32 %v144, %v150
  %152 = vst [vmem:[%s3] sm:$0x1] %v151
  %v153 = vld [vmem:[%s4] sm:$0x1]
  %v154 = vmul.f32 %v143, %v130
  %v155 = vrot.slane %v154, 4
  %v156 = vadd.f32 %v154, %v155
  %v157 = vrot.slane %v156, 2
  %v158 = vadd.f32 %v156, %v157
  %v159 = vrot.slane %v158, 1
  %v160 = vadd.f32 %v158, %v159
  %v161 = vadd.f32 %v153, %v160
  %162 = vst [vmem:[%s4] sm:$0x1] %v161
  // Predicated region
  $region18: #{discriminator_forward.2} parent=0 // pred_check
    _
  $region19: #{discriminator_forward.2} parent=0 // pred_check_branch
    %164 = sbr.rel (0) target = $region21
  $region20: #{discriminator_forward.2} parent=0 // pred_region
    _
  $region21: #{discriminator_forward.2} parent=0 // pred_fallthru
    _
  // Predicated region
  $region22: #{discriminator_forward.2} parent=0 // pred_check
    _
  $region23: #{discriminator_forward.2} parent=0 // pred_check_branch
    %166 = sbr.rel (0) target = $region25
  $region24: #{discriminator_forward.2} parent=0 // pred_region
    _
  $region25: #{discriminator_forward.2} parent=0 // pred_fallthru
    _
  // Predicated region
  $region26: #{discriminator_forward.2} parent=0 // pred_check
    _
  $region27: #{discriminator_forward.2} parent=0 // pred_check_branch
    %168 = sbr.rel (0) target = $region29
  $region28: #{discriminator_forward.2} parent=0 // pred_region
    _
  $region29: #{discriminator_forward.2} parent=0 // pred_fallthru
    _
  // Predicated region
  $region30: #{discriminator_forward.2} parent=0 // pred_check
    _
  $region31: #{discriminator_forward.2} parent=0 // pred_check_branch
    %170 = sbr.rel (0) target = $region33
  $region32: #{discriminator_forward.2} parent=0 // pred_region
    _
  $region33: #{discriminator_forward.2} parent=0 // pred_fallthru
    _

// kernel: discriminator_forward.3
$region0: #{discriminator_forward.3}
  #allocation0 [shape = 'u32[]', space=smem, size = 0x4, offset = 0x4, fixed_abs, tag = 'smem constant byte address 0x4 - core index']
  #allocation1 [shape = 'u32[144,128]{1,0:T(1,128)}', space=vmem, size = 0x12000, scoped, tag = 'internal scratch']
  %s0 = inlined_call_operand.vmem [shape: bf16[8,128], index: 0, kind: input, shape index: {}]
  %s1 = inlined_call_operand.vmem [shape: f32[1,128], index: 1, kind: input, shape index: {}]
  %s2 = inlined_call_operand.vmem [shape: f32[1,128], index: 2, kind: input, shape index: {}]
  %s3 = inlined_call_operand.vmem [shape: f32[1,128], index: 3, kind: input, shape index: {}]
  %s4 = inlined_call_operand.vmem [shape: f32[1,128], index: 4, kind: input, shape index: {}]
  %s5 = inlined_call_operand.vmem [shape: bf16[128,128], index: 5, kind: input, shape index: {}]
  %s6 = inlined_call_operand.vmem [shape: f32[1,128], index: 6, kind: input, shape index: {}]
  %s7 = inlined_call_operand.vmem [shape: bf16[128,128], index: 7, kind: input, shape index: {}]
  %s8 = inlined_call_operand.vmem [shape: f32[1,128], index: 8, kind: input, shape index: {}]
  %s9 = inlined_call_operand.vmem [shape: bf16[128,128], index: 9, kind: input, shape index: {}]
  %s10 = inlined_call_operand.vmem [shape: f32[1,128], index: 10, kind: input, shape index: {}]
  %s11 = inlined_call_operand.vmem [shape: bf16[128,128], index: 11, kind: input, shape index: {}]
  %s12 = inlined_call_operand.vmem [shape: f32[1,128], index: 12, kind: input, shape index: {}]
  %s13 = inlined_call_operand.vmem [shape: bf16[128,128], index: 13, kind: input, shape index: {}]
  %s14 = inlined_call_operand.vmem [shape: f32[1,128], index: 14, kind: input, shape index: {}]
  %s15 = inlined_call_operand.vmem [shape: f32[8,128], index: 15, kind: output, shape index: {}]
  %s16 = sld [smem:[#allocation0]]
  $region70: #{discriminator_forward.3} parent=0
    _
  %s18 = ssub.s32 1, %s16
  %s19 = scalar_select 0, %s18, %s16
  // Predicated region
  $region2: #{discriminator_forward.3} parent=0 // pred_check
    _
  $region3: #{discriminator_forward.3} parent=0 // pred_check_branch
    %21 = sbr.rel (0) target = $region5
  $region4: #{discriminator_forward.3} parent=0 // pred_region
    _
  $region5: #{discriminator_forward.3} parent=0 // pred_fallthru
    _
  // Predicated region
  $region6: #{discriminator_forward.3} parent=0 // pred_check
    _
  $region7: #{discriminator_forward.3} parent=0 // pred_check_branch
    %23 = sbr.rel (0) target = $region9
  $region8: #{discriminator_forward.3} parent=0 // pred_region
    _
  $region9: #{discriminator_forward.3} parent=0 // pred_fallthru
    _
  // Predicated region
  $region10: #{discriminator_forward.3} parent=0 // pred_check
    _
  $region11: #{discriminator_forward.3} parent=0 // pred_check_branch
    %25 = sbr.rel (0) target = $region13
  $region12: #{discriminator_forward.3} parent=0 // pred_region
    _
  $region13: #{discriminator_forward.3} parent=0 // pred_fallthru
    _
  // Predicated region
  $region14: #{discriminator_forward.3} parent=0 // pred_check
    _
  $region15: #{discriminator_forward.3} parent=0 // pred_check_branch
    %27 = sbr.rel (0) target = $region17
  $region16: #{discriminator_forward.3} parent=0 // pred_region
    _
  $region17: #{discriminator_forward.3} parent=0 // pred_fallthru
    _
  // Predicated region
  $region18: #{discriminator_forward.3} parent=0 // pred_check
    _
  $region19: #{discriminator_forward.3} parent=0 // pred_check_branch
    %29 = sbr.rel (0) target = $region21
  $region20: #{discriminator_forward.3} parent=0 // pred_region
    _
  $region21: #{discriminator_forward.3} parent=0 // pred_fallthru
    _
  // Predicated region
  $region22: #{discriminator_forward.3} parent=0 // pred_check
    _
  $region23: #{discriminator_forward.3} parent=0 // pred_check_branch
    %31 = sbr.rel (0) target = $region25
  $region24: #{discriminator_forward.3} parent=0 // pred_region
    _
  $region25: #{discriminator_forward.3} parent=0 // pred_fallthru
    _
  // Predicated region
  $region26: #{discriminator_forward.3} parent=0 // pred_check
    _
  $region27: #{discriminator_forward.3} parent=0 // pred_check_branch
    %33 = sbr.rel (0) target = $region29
  $region28: #{discriminator_forward.3} parent=0 // pred_region
    _
  $region29: #{discriminator_forward.3} parent=0 // pred_fallthru
    _
  // Predicated region
  $region30: #{discriminator_forward.3} parent=0 // pred_check
    _
  $region31: #{discriminator_forward.3} parent=0 // pred_check_branch
    %35 = sbr.rel (0) target = $region33
  $region32: #{discriminator_forward.3} parent=0 // pred_region
    _
  $region33: #{discriminator_forward.3} parent=0 // pred_fallthru
    _
  // Predicated region
  $region34: #{discriminator_forward.3} parent=0 // pred_check
    _
  $region35: #{discriminator_forward.3} parent=0 // pred_check_branch
    %37 = sbr.rel (0) target = $region37
  $region36: #{discriminator_forward.3} parent=0 // pred_region
    _
  $region37: #{discriminator_forward.3} parent=0 // pred_fallthru
    _
  // Predicated region
  $region38: #{discriminator_forward.3} parent=0 // pred_check
    _
  $region39: #{discriminator_forward.3} parent=0 // pred_check_branch
    %39 = sbr.rel (0) target = $region41
  $region40: #{discriminator_forward.3} parent=0 // pred_region
    _
  $region41: #{discriminator_forward.3} parent=0 // pred_fallthru
    _
  // Predicated region
  $region42: #{discriminator_forward.3} parent=0 // pred_check
    _
  $region43: #{discriminator_forward.3} parent=0 // pred_check_branch
    %41 = sbr.rel (0) target = $region45
  $region44: #{discriminator_forward.3} parent=0 // pred_region
    _
  $region45: #{discriminator_forward.3} parent=0 // pred_fallthru
    _
  // Predicated region
  $region46: #{discriminator_forward.3} parent=0 // pred_check
    _
  $region47: #{discriminator_forward.3} parent=0 // pred_check_branch
    %43 = sbr.rel (0) target = $region49
  $region48: #{discriminator_forward.3} parent=0 // pred_region
    _
  $region49: #{discriminator_forward.3} parent=0 // pred_fallthru
    _
  // Predicated region
  $region50: #{discriminator_forward.3} parent=0 // pred_check
    _
  $region51: #{discriminator_forward.3} parent=0 // pred_check_branch
    %45 = sbr.rel (0) target = $region53
  $region52: #{discriminator_forward.3} parent=0 // pred_region
    _
  $region53: #{discriminator_forward.3} parent=0 // pred_fallthru
    _
  // Predicated region
  $region54: #{discriminator_forward.3} parent=0 // pred_check
    _
  $region55: #{discriminator_forward.3} parent=0 // pred_check_branch
    %47 = sbr.rel (0) target = $region57
  $region56: #{discriminator_forward.3} parent=0 // pred_region
    _
  $region57: #{discriminator_forward.3} parent=0 // pred_fallthru
    _
  // Predicated region
  $region58: #{discriminator_forward.3} parent=0 // pred_check
    _
  $region59: #{discriminator_forward.3} parent=0 // pred_check_branch
    %49 = sbr.rel (0) target = $region61
  $region60: #{discriminator_forward.3} parent=0 // pred_region
    _
  $region61: #{discriminator_forward.3} parent=0 // pred_fallthru
    _
  %v51 = vld [vmem:[%s0] sm:$0xf]
  %v52 = vld [vmem:[%s5] sm:$0xf]
  %v53 = vld [vmem:[%s5 + $0x4] sm:$0xf]
  %v54 = vld [vmem:[%s5 + $0x8] sm:$0xf]
  %v55 = vld [vmem:[%s5 + $0xc] sm:$0xf]
  %v56 = vld [vmem:[%s5 + $0x10] sm:$0xf]
  %v57 = vld [vmem:[%s5 + $0x14] sm:$0xf]
  %v58 = vld [vmem:[%s5 + $0x18] sm:$0xf]
  %v59 = vld [vmem:[%s5 + $0x1c] sm:$0xf]
  %v60 = vld [vmem:[%s5 + $0x20] sm:$0xf]
  %v61 = vld [vmem:[%s5 + $0x24] sm:$0xf]
  %v62 = vld [vmem:[%s5 + $0x28] sm:$0xf]
  %v63 = vld [vmem:[%s5 + $0x2c] sm:$0xf]
  %v64 = vld [vmem:[%s5 + $0x30] sm:$0xf]
  %v65 = vld [vmem:[%s5 + $0x34] sm:$0xf]
  %v66 = vld [vmem:[%s5 + $0x38] sm:$0xf]
  %v67 = vld [vmem:[%s5 + $0x3c] sm:$0xf]
  %v68 = vld [vmem:[%s6] sm:$0x1]
  %v70 = vlaneseq
  %v71 = vshrl.u32 %v70, 7
  %v72 = vsub.s32 0, %v71
  %v73 = vrot.slane %v68, %v72
  %v91 = vunpack.c.l.b16 %v52
  %v92 = vunpack.c.l.b16 %v53
  %v93 = vunpack.c.l.b16 %v54
  %v94 = vunpack.c.l.b16 %v55
  %v95 = vunpack.c.l.b16 %v56
  %v96 = vunpack.c.l.b16 %v57
  %v97 = vunpack.c.l.b16 %v58
  %v98 = vunpack.c.l.b16 %v59
  %v99 = vunpack.c.l.b16 %v60
  %v100 = vunpack.c.l.b16 %v61
  %v101 = vunpack.c.l.b16 %v62
  %v102 = vunpack.c.l.b16 %v63
  %v103 = vunpack.c.l.b16 %v64
  %v104 = vunpack.c.l.b16 %v65
  %v105 = vunpack.c.l.b16 %v66
  %v106 = vunpack.c.l.b16 %v67
  %v107 = vpack.c.b16 %v92, %v91
  %v108 = vpack.c.b16 %v94, %v93
  %v109 = vpack.c.b16 %v96, %v95
  %v110 = vpack.c.b16 %v98, %v97
  %v111 = vpack.c.b16 %v100, %v99
  %v112 = vpack.c.b16 %v102, %v101
  %v113 = vpack.c.b16 %v104, %v103
  %v114 = vpack.c.b16 %v106, %v105
  %123 = vmatprep.subr.bf16.mxu0 0
  %124 = vmatpush1.bf16.msra.mxu0 %v114
  %125 = vmatprep.subr.bf16.mxu0 0
  %126 = vmatpush1.bf16.msra.mxu0 %v113
  %127 = vmatprep.subr.bf16.mxu0 0
  %128 = vmatpush1.bf16.msra.mxu0 %v112
  %129 = vmatprep.subr.bf16.mxu0 0
  %130 = vmatpush1.bf16.msra.mxu0 %v111
  %131 = vmatprep.subr.bf16.mxu0 0
  %132 = vmatpush1.bf16.msra.mxu0 %v110
  %133 = vmatprep.subr.bf16.mxu0 0
  %134 = vmatpush1.bf16.msra.mxu0 %v109
  %135 = vmatprep.subr.bf16.mxu0 0
  %136 = vmatpush1.bf16.msra.mxu0 %v108
  %137 = vmatprep.subr.bf16.mxu0 0
  %138 = vmatpush1.bf16.msra.mxu0 %v107
  %139 = vmatprep.subr.bf16.mxu0 0
  %140 = vmatpush2.bf16.msra.mxu0 0
  %141 = vmatprep.subr.bf16.mxu0 0
  %142 = vmatpush2.bf16.msra.mxu0 0
  %143 = vmatprep.subr.bf16.mxu0 0
  %144 = vmatpush2.bf16.msra.mxu0 0
  %145 = vmatprep.subr.bf16.mxu0 0
  %146 = vmatpush2.bf16.msra.mxu0 0
  %147 = vmatprep.subr.bf16.mxu0 0
  %148 = vmatpush2.bf16.msra.mxu0 0
  %149 = vmatprep.subr.bf16.mxu0 0
  %150 = vmatpush2.bf16.msra.mxu0 0
  %151 = vmatprep.subr.bf16.mxu0 0
  %152 = vmatpush2.bf16.msra.mxu0 0
  %153 = vmatprep.subr.bf16.mxu0 0
  %154 = vmatpush2.bf16.msra.mxu0 0
  %155 = vmatprep.mubr.bf16.mxu0 0
  %156 = vmatmul.mubr.bf16.gmra.mxu0 %v51
  %v157 = vpop.f32.mrf.mxu0
  %v158 = vadd.f32 %v73, %v157
  %v159 = vpop.f32.mrf.mxu0
  %v160 = vpop.f32.mrf.mxu0
  %v161 = vpop.f32.mrf.mxu0
  %162 = vdwg.mxu0
  %v163 = vld [vmem:[%s1] sm:$0x1]
  %v164 = vmul.f32 %v163, 0.125
  %v165 = vld [vmem:[%s2] sm:$0x1]
  %v166 = vmul.f32 %v165, 0.125
  %v167 = vmul.f32 %v164, %v164
  %v168 = vsub.f32 %v166, %v167
  %v169 = vmax.f32 %v168, 0.0
  %v170 = vld [vmem:[%s3] sm:$0x1]
  %v171 = vadd.f32 %v169, 1e-05
  %v172 = vrsqrt.pop %v171
  %v173 = vmul.f32 %v170, %v172
  %v174 = vld [vmem:[%s4] sm:$0x1]
  %v175 = vmul.f32 %v164, %v173
  %v176 = vsub.f32 %v174, %v175
  %v178 = vlaneseq
  %v179 = vshrl.u32 %v178, 7
  %v180 = vsub.s32 0, %v179
  %v181 = vrot.slane %v173, %v180
  %v183 = vmul.f32 %v158, %v181
  %v185 = vlaneseq
  %v186 = vshrl.u32 %v185, 7
  %v187 = vsub.s32 0, %v186
  %v188 = vrot.slane %v176, %v187
  %v190 = vadd.f32 %v183, %v188
  %v191 = vxor.u32 %v190, 2147483648
  %v192 = vmul.f32 %v191, 1.442695
  %v193 = vpow.pop %v192
  %v194 = vadd.f32 %v193, 1.0
  %v195 = vrcp.pop %v194
  %v196 = vmul.f32 1.0, %v195
  %v197 = vpack.c.bf16 %v196, %v196
  %v198 = vld [vmem:[%s7] sm:$0xf]
  %v199 = vld [vmem:[%s7 + $0x4] sm:$0xf]
  %v200 = vld [vmem:[%s7 + $0x8] sm:$0xf]
  %v201 = vld [vmem:[%s7 + $0xc] sm:$0xf]
  %v202 = vld [vmem:[%s7 + $0x10] sm:$0xf]
  %v203 = vld [vmem:[%s7 + $0x14] sm:$0xf]
  %v204 = vld [vmem:[%s7 + $0x18] sm:$0xf]
  %v205 = vld [vmem:[%s7 + $0x1c] sm:$0xf]
  %v206 = vld [vmem:[%s7 + $0x20] sm:$0xf]
  %v207 = vld [vmem:[%s7 + $0x24] sm:$0xf]
  %v208 = vld [vmem:[%s7 + $0x28] sm:$0xf]
  %v209 = vld [vmem:[%s7 + $0x2c] sm:$0xf]
  %v210 = vld [vmem:[%s7 + $0x30] sm:$0xf]
  %v211 = vld [vmem:[%s7 + $0x34] sm:$0xf]
  %v212 = vld [vmem:[%s7 + $0x38] sm:$0xf]
  %v213 = vld [vmem:[%s7 + $0x3c] sm:$0xf]
  %v214 = vld [vmem:[%s8] sm:$0x1]
  %v216 = vlaneseq
  %v217 = vshrl.u32 %v216, 7
  %v218 = vsub.s32 0, %v217
  %v219 = vrot.slane %v214, %v218
  %v237 = vunpack.c.l.b16 %v198
  %v238 = vunpack.c.l.b16 %v199
  %v239 = vunpack.c.l.b16 %v200
  %v240 = vunpack.c.l.b16 %v201
  %v241 = vunpack.c.l.b16 %v202
  %v242 = vunpack.c.l.b16 %v203
  %v243 = vunpack.c.l.b16 %v204
  %v244 = vunpack.c.l.b16 %v205
  %v245 = vunpack.c.l.b16 %v206
  %v246 = vunpack.c.l.b16 %v207
  %v247 = vunpack.c.l.b16 %v208
  %v248 = vunpack.c.l.b16 %v209
  %v249 = vunpack.c.l.b16 %v210
  %v250 = vunpack.c.l.b16 %v211
  %v251 = vunpack.c.l.b16 %v212
  %v252 = vunpack.c.l.b16 %v213
  %v253 = vpack.c.b16 %v238, %v237
  %v254 = vpack.c.b16 %v240, %v239
  %v255 = vpack.c.b16 %v242, %v241
  %v256 = vpack.c.b16 %v244, %v243
  %v257 = vpack.c.b16 %v246, %v245
  %v258 = vpack.c.b16 %v248, %v247
  %v259 = vpack.c.b16 %v250, %v249
  %v260 = vpack.c.b16 %v252, %v251
  %269 = vmatprep.subr.bf16.mxu0 0
  %270 = vmatpush1.bf16.msra.mxu0 %v260
  %271 = vmatprep.subr.bf16.mxu0 0
  %272 = vmatpush1.bf16.msra.mxu0 %v259
  %273 = vmatprep.subr.bf16.mxu0 0
  %274 = vmatpush1.bf16.msra.mxu0 %v258
  %275 = vmatprep.subr.bf16.mxu0 0
  %276 = vmatpush1.bf16.msra.mxu0 %v257
  %277 = vmatprep.subr.bf16.mxu0 0
  %278 = vmatpush1.bf16.msra.mxu0 %v256
  %279 = vmatprep.subr.bf16.mxu0 0
  %280 = vmatpush1.bf16.msra.mxu0 %v255
  %281 = vmatprep.subr.bf16.mxu0 0
  %282 = vmatpush1.bf16.msra.mxu0 %v254
  %283 = vmatprep.subr.bf16.mxu0 0
  %284 = vmatpush1.bf16.msra.mxu0 %v253
  %285 = vmatprep.subr.bf16.mxu0 0
  %286 = vmatpush2.bf16.msra.mxu0 0
  %287 = vmatprep.subr.bf16.mxu0 0
  %288 = vmatpush2.bf16.msra.mxu0 0
  %289 = vmatprep.subr.bf16.mxu0 0
  %290 = vmatpush2.bf16.msra.mxu0 0
  %291 = vmatprep.subr.bf16.mxu0 0
  %292 = vmatpush2.bf16.msra.mxu0 0
  %293 = vmatprep.subr.bf16.mxu0 0
  %294 = vmatpush2.bf16.msra.mxu0 0
  %295 = vmatprep.subr.bf16.mxu0 0
  %296 = vmatpush2.bf16.msra.mxu0 0
  %297 = vmatprep.subr.bf16.mxu0 0
  %298 = vmatpush2.bf16.msra.mxu0 0
  %299 = vmatprep.subr.bf16.mxu0 0
  %300 = vmatpush2.bf16.msra.mxu0 0
  %301 = vmatprep.mubr.bf16.mxu0 0
  %302 = vmatmul.mubr.bf16.gmra.mxu0 %v197
  %v303 = vpop.f32.mrf.mxu0
  %v304 = vadd.f32 %v219, %v303
  %v305 = vpop.f32.mrf.mxu0
  %v306 = vpop.f32.mrf.mxu0
  %v307 = vpop.f32.mrf.mxu0
  %308 = vdwg.mxu0
  %v309 = vxor.u32 %v304, 2147483648
  %v310 = vmul.f32 %v309, 1.442695
  %v311 = vpow.pop %v310
  %v312 = vadd.f32 %v311, 1.0
  %v313 = vrcp.pop %v312
  %v314 = vmul.f32 1.0, %v313
  %v315 = vpack.c.bf16 %v314, %v314
  %v316 = vld [vmem:[%s9] sm:$0xf]
  %v317 = vld [vmem:[%s9 + $0x4] sm:$0xf]
  %v318 = vld [vmem:[%s9 + $0x8] sm:$0xf]
  %v319 = vld [vmem:[%s9 + $0xc] sm:$0xf]
  %v320 = vld [vmem:[%s9 + $0x10] sm:$0xf]
  %v321 = vld [vmem:[%s9 + $0x14] sm:$0xf]
  %v322 = vld [vmem:[%s9 + $0x18] sm:$0xf]
  %v323 = vld [vmem:[%s9 + $0x1c] sm:$0xf]
  %v324 = vld [vmem:[%s9 + $0x20] sm:$0xf]
  %v325 = vld [vmem:[%s9 + $0x24] sm:$0xf]
  %v326 = vld [vmem:[%s9 + $0x28] sm:$0xf]
  %v327 = vld [vmem:[%s9 + $0x2c] sm:$0xf]
  %v328 = vld [vmem:[%s9 + $0x30] sm:$0xf]
  %v329 = vld [vmem:[%s9 + $0x34] sm:$0xf]
  %v330 = vld [vmem:[%s9 + $0x38] sm:$0xf]
  %v331 = vld [vmem:[%s9 + $0x3c] sm:$0xf]
  %v332 = vld [vmem:[%s10] sm:$0x1]
  %v334 = vlaneseq
  %v335 = vshrl.u32 %v334, 7
  %v336 = vsub.s32 0, %v335
  %v337 = vrot.slane %v332, %v336
  %v355 = vunpack.c.l.b16 %v316
  %v356 = vunpack.c.l.b16 %v317
  %v357 = vunpack.c.l.b16 %v318
  %v358 = vunpack.c.l.b16 %v319
  %v359 = vunpack.c.l.b16 %v320
  %v360 = vunpack.c.l.b16 %v321
  %v361 = vunpack.c.l.b16 %v322
  %v362 = vunpack.c.l.b16 %v323
  %v363 = vunpack.c.l.b16 %v324
  %v364 = vunpack.c.l.b16 %v325
  %v365 = vunpack.c.l.b16 %v326
  %v366 = vunpack.c.l.b16 %v327
  %v367 = vunpack.c.l.b16 %v328
  %v368 = vunpack.c.l.b16 %v329
  %v369 = vunpack.c.l.b16 %v330
  %v370 = vunpack.c.l.b16 %v331
  %v371 = vpack.c.b16 %v356, %v355
  %v372 = vpack.c.b16 %v358, %v357
  %v373 = vpack.c.b16 %v360, %v359
  %v374 = vpack.c.b16 %v362, %v361
  %v375 = vpack.c.b16 %v364, %v363
  %v376 = vpack.c.b16 %v366, %v365
  %v377 = vpack.c.b16 %v368, %v367
  %v378 = vpack.c.b16 %v370, %v369
  %387 = vmatprep.subr.bf16.mxu0 0
  %388 = vmatpush1.bf16.msra.mxu0 %v378
  %389 = vmatprep.subr.bf16.mxu0 0
  %390 = vmatpush1.bf16.msra.mxu0 %v377
  %391 = vmatprep.subr.bf16.mxu0 0
  %392 = vmatpush1.bf16.msra.mxu0 %v376
  %393 = vmatprep.subr.bf16.mxu0 0
  %394 = vmatpush1.bf16.msra.mxu0 %v375
  %395 = vmatprep.subr.bf16.mxu0 0
  %396 = vmatpush1.bf16.msra.mxu0 %v374
  %397 = vmatprep.subr.bf16.mxu0 0
  %398 = vmatpush1.bf16.msra.mxu0 %v373
  %399 = vmatprep.subr.bf16.mxu0 0
  %400 = vmatpush1.bf16.msra.mxu0 %v372
  %401 = vmatprep.subr.bf16.mxu0 0
  %402 = vmatpush1.bf16.msra.mxu0 %v371
  %403 = vmatprep.subr.bf16.mxu0 0
  %404 = vmatpush2.bf16.msra.mxu0 0
  %405 = vmatprep.subr.bf16.mxu0 0
  %406 = vmatpush2.bf16.msra.mxu0 0
  %407 = vmatprep.subr.bf16.mxu0 0
  %408 = vmatpush2.bf16.msra.mxu0 0
  %409 = vmatprep.subr.bf16.mxu0 0
  %410 = vmatpush2.bf16.msra.mxu0 0
  %411 = vmatprep.subr.bf16.mxu0 0
  %412 = vmatpush2.bf16.msra.mxu0 0
  %413 = vmatprep.subr.bf16.mxu0 0
  %414 = vmatpush2.bf16.msra.mxu0 0
  %415 = vmatprep.subr.bf16.mxu0 0
  %416 = vmatpush2.bf16.msra.mxu0 0
  %417 = vmatprep.subr.bf16.mxu0 0
  %418 = vmatpush2.bf16.msra.mxu0 0
  %419 = vmatprep.mubr.bf16.mxu0 0
  %420 = vmatmul.mubr.bf16.gmra.mxu0 %v315
  %v421 = vpop.f32.mrf.mxu0
  %v422 = vadd.f32 %v337, %v421
  %v423 = vpop.f32.mrf.mxu0
  %v424 = vpop.f32.mrf.mxu0
  %v425 = vpop.f32.mrf.mxu0
  %426 = vdwg.mxu0
  %v427 = vxor.u32 %v422, 2147483648
  %v428 = vmul.f32 %v427, 1.442695
  %v429 = vpow.pop %v428
  %v430 = vadd.f32 %v429, 1.0
  %v431 = vrcp.pop %v430
  %v432 = vmul.f32 1.0, %v431
  %v433 = vpack.c.bf16 %v432, %v432
  %v434 = vld [vmem:[%s11] sm:$0xf]
  %v435 = vld [vmem:[%s11 + $0x4] sm:$0xf]
  %v436 = vld [vmem:[%s11 + $0x8] sm:$0xf]
  %v437 = vld [vmem:[%s11 + $0xc] sm:$0xf]
  %v438 = vld [vmem:[%s11 + $0x10] sm:$0xf]
  %v439 = vld [vmem:[%s11 + $0x14] sm:$0xf]
  %v440 = vld [vmem:[%s11 + $0x18] sm:$0xf]
  %v441 = vld [vmem:[%s11 + $0x1c] sm:$0xf]
  %v442 = vld [vmem:[%s11 + $0x20] sm:$0xf]
  %v443 = vld [vmem:[%s11 + $0x24] sm:$0xf]
  %v444 = vld [vmem:[%s11 + $0x28] sm:$0xf]
  %v445 = vld [vmem:[%s11 + $0x2c] sm:$0xf]
  %v446 = vld [vmem:[%s11 + $0x30] sm:$0xf]
  %v447 = vld [vmem:[%s11 + $0x34] sm:$0xf]
  %v448 = vld [vmem:[%s11 + $0x38] sm:$0xf]
  %v449 = vld [vmem:[%s11 + $0x3c] sm:$0xf]
  %v450 = vld [vmem:[%s12] sm:$0x1]
  %v452 = vlaneseq
  %v453 = vshrl.u32 %v452, 7
  %v454 = vsub.s32 0, %v453
  %v455 = vrot.slane %v450, %v454
  %v473 = vunpack.c.l.b16 %v434
  %v474 = vunpack.c.l.b16 %v435
  %v475 = vunpack.c.l.b16 %v436
  %v476 = vunpack.c.l.b16 %v437
  %v477 = vunpack.c.l.b16 %v438
  %v478 = vunpack.c.l.b16 %v439
  %v479 = vunpack.c.l.b16 %v440
  %v480 = vunpack.c.l.b16 %v441
  %v481 = vunpack.c.l.b16 %v442
  %v482 = vunpack.c.l.b16 %v443
  %v483 = vunpack.c.l.b16 %v444
  %v484 = vunpack.c.l.b16 %v445
  %v485 = vunpack.c.l.b16 %v446
  %v486 = vunpack.c.l.b16 %v447
  %v487 = vunpack.c.l.b16 %v448
  %v488 = vunpack.c.l.b16 %v449
  %v489 = vpack.c.b16 %v474, %v473
  %v490 = vpack.c.b16 %v476, %v475
  %v491 = vpack.c.b16 %v478, %v477
  %v492 = vpack.c.b16 %v480, %v479
  %v493 = vpack.c.b16 %v482, %v481
  %v494 = vpack.c.b16 %v484, %v483
  %v495 = vpack.c.b16 %v486, %v485
  %v496 = vpack.c.b16 %v488, %v487
  %505 = vmatprep.subr.bf16.mxu0 0
  %506 = vmatpush1.bf16.msra.mxu0 %v496
  %507 = vmatprep.subr.bf16.mxu0 0
  %508 = vmatpush1.bf16.msra.mxu0 %v495
  %509 = vmatprep.subr.bf16.mxu0 0
  %510 = vmatpush1.bf16.msra.mxu0 %v494
  %511 = vmatprep.subr.bf16.mxu0 0
  %512 = vmatpush1.bf16.msra.mxu0 %v493
  %513 = vmatprep.subr.bf16.mxu0 0
  %514 = vmatpush1.bf16.msra.mxu0 %v492
  %515 = vmatprep.subr.bf16.mxu0 0
  %516 = vmatpush1.bf16.msra.mxu0 %v491
  %517 = vmatprep.subr.bf16.mxu0 0
  %518 = vmatpush1.bf16.msra.mxu0 %v490
  %519 = vmatprep.subr.bf16.mxu0 0
  %520 = vmatpush1.bf16.msra.mxu0 %v489
  %521 = vmatprep.subr.bf16.mxu0 0
  %522 = vmatpush2.bf16.msra.mxu0 0
  %523 = vmatprep.subr.bf16.mxu0 0
  %524 = vmatpush2.bf16.msra.mxu0 0
  %525 = vmatprep.subr.bf16.mxu0 0
  %526 = vmatpush2.bf16.msra.mxu0 0
  %527 = vmatprep.subr.bf16.mxu0 0
  %528 = vmatpush2.bf16.msra.mxu0 0
  %529 = vmatprep.subr.bf16.mxu0 0
  %530 = vmatpush2.bf16.msra.mxu0 0
  %531 = vmatprep.subr.bf16.mxu0 0
  %532 = vmatpush2.bf16.msra.mxu0 0
  %533 = vmatprep.subr.bf16.mxu0 0
  %534 = vmatpush2.bf16.msra.mxu0 0
  %535 = vmatprep.subr.bf16.mxu0 0
  %536 = vmatpush2.bf16.msra.mxu0 0
  %537 = vmatprep.mubr.bf16.mxu0 0
  %538 = vmatmul.mubr.bf16.gmra.mxu0 %v433
  %v539 = vpop.f32.mrf.mxu0
  %v540 = vadd.f32 %v455, %v539
  %v541 = vpop.f32.mrf.mxu0
  %v542 = vpop.f32.mrf.mxu0
  %v543 = vpop.f32.mrf.mxu0
  %544 = vdwg.mxu0
  %v545 = vxor.u32 %v540, 2147483648
  %v546 = vmul.f32 %v545, 1.442695
  %v547 = vpow.pop %v546
  %v548 = vadd.f32 %v547, 1.0
  %v549 = vrcp.pop %v548
  %v550 = vmul.f32 1.0, %v549
  %v551 = vpack.c.bf16 %v550, %v550
  %v552 = vld [vmem:[%s13] sm:$0xf]
  %v553 = vld [vmem:[%s13 + $0x4] sm:$0xf]
  %v554 = vld [vmem:[%s13 + $0x8] sm:$0xf]
  %v555 = vld [vmem:[%s13 + $0xc] sm:$0xf]
  %v556 = vld [vmem:[%s13 + $0x10] sm:$0xf]
  %v557 = vld [vmem:[%s13 + $0x14] sm:$0xf]
  %v558 = vld [vmem:[%s13 + $0x18] sm:$0xf]
  %v559 = vld [vmem:[%s13 + $0x1c] sm:$0xf]
  %v560 = vld [vmem:[%s13 + $0x20] sm:$0xf]
  %v561 = vld [vmem:[%s13 + $0x24] sm:$0xf]
  %v562 = vld [vmem:[%s13 + $0x28] sm:$0xf]
  %v563 = vld [vmem:[%s13 + $0x2c] sm:$0xf]
  %v564 = vld [vmem:[%s13 + $0x30] sm:$0xf]
  %v565 = vld [vmem:[%s13 + $0x34] sm:$0xf]
  %v566 = vld [vmem:[%s13 + $0x38] sm:$0xf]
  %v567 = vld [vmem:[%s13 + $0x3c] sm:$0xf]
  %v568 = vld [vmem:[%s14] sm:$0x1]
  %v570 = vlaneseq
  %v571 = vshrl.u32 %v570, 7
  %v572 = vsub.s32 0, %v571
  %v573 = vrot.slane %v568, %v572
  %v591 = vunpack.c.l.b16 %v552
  %v592 = vunpack.c.l.b16 %v553
  %v593 = vunpack.c.l.b16 %v554
  %v594 = vunpack.c.l.b16 %v555
  %v595 = vunpack.c.l.b16 %v556
  %v596 = vunpack.c.l.b16 %v557
  %v597 = vunpack.c.l.b16 %v558
  %v598 = vunpack.c.l.b16 %v559
  %v599 = vunpack.c.l.b16 %v560
  %v600 = vunpack.c.l.b16 %v561
  %v601 = vunpack.c.l.b16 %v562
  %v602 = vunpack.c.l.b16 %v563
  %v603 = vunpack.c.l.b16 %v564
  %v604 = vunpack.c.l.b16 %v565
  %v605 = vunpack.c.l.b16 %v566
  %v606 = vunpack.c.l.b16 %v567
  %v607 = vpack.c.b16 %v592, %v591
  %v608 = vpack.c.b16 %v594, %v593
  %v609 = vpack.c.b16 %v596, %v595
  %v610 = vpack.c.b16 %v598, %v597
  %v611 = vpack.c.b16 %v600, %v599
  %v612 = vpack.c.b16 %v602, %v601
  %v613 = vpack.c.b16 %v604, %v603
  %v614 = vpack.c.b16 %v606, %v605
  %623 = vmatprep.subr.bf16.mxu0 0
  %624 = vmatpush1.bf16.msra.mxu0 %v614
  %625 = vmatprep.subr.bf16.mxu0 0
  %626 = vmatpush1.bf16.msra.mxu0 %v613
  %627 = vmatprep.subr.bf16.mxu0 0
  %628 = vmatpush1.bf16.msra.mxu0 %v612
  %629 = vmatprep.subr.bf16.mxu0 0
  %630 = vmatpush1.bf16.msra.mxu0 %v611
  %631 = vmatprep.subr.bf16.mxu0 0
  %632 = vmatpush1.bf16.msra.mxu0 %v610
  %633 = vmatprep.subr.bf16.mxu0 0
  %634 = vmatpush1.bf16.msra.mxu0 %v609
  %635 = vmatprep.subr.bf16.mxu0 0
  %636 = vmatpush1.bf16.msra.mxu0 %v608
  %637 = vmatprep.subr.bf16.mxu0 0
  %638 = vmatpush1.bf16.msra.mxu0 %v607
  %639 = vmatprep.subr.bf16.mxu0 0
  %640 = vmatpush2.bf16.msra.mxu0 0
  %641 = vmatprep.subr.bf16.mxu0 0
  %642 = vmatpush2.bf16.msra.mxu0 0
  %643 = vmatprep.subr.bf16.mxu0 0
  %644 = vmatpush2.bf16.msra.mxu0 0
  %645 = vmatprep.subr.bf16.mxu0 0
  %646 = vmatpush2.bf16.msra.mxu0 0
  %647 = vmatprep.subr.bf16.mxu0 0
  %648 = vmatpush2.bf16.msra.mxu0 0
  %649 = vmatprep.subr.bf16.mxu0 0
  %650 = vmatpush2.bf16.msra.mxu0 0
  %651 = vmatprep.subr.bf16.mxu0 0
  %652 = vmatpush2.bf16.msra.mxu0 0
  %653 = vmatprep.subr.bf16.mxu0 0
  %654 = vmatpush2.bf16.msra.mxu0 0
  %655 = vmatprep.mubr.bf16.mxu0 0
  %656 = vmatmul.mubr.bf16.gmra.mxu0 %v551
  %v657 = vpop.f32.mrf.mxu0
  %v658 = vadd.f32 %v573, %v657
  %v659 = vpop.f32.mrf.mxu0
  %v660 = vpop.f32.mrf.mxu0
  %v661 = vpop.f32.mrf.mxu0
  %662 = vdwg.mxu0
  %v663 = vxor.u32 %v658, 2147483648
  %v664 = vmul.f32 %v663, 1.442695
  %v665 = vpow.pop %v664
  %v666 = vadd.f32 %v665, 1.0
  %v667 = vrcp.pop %v666
  %v668 = vmul.f32 1.0, %v667
  %669 = vst [vmem:[%s15] sm:$0xff] %v668
  // Predicated region
  $region62: #{discriminator_forward.3} parent=0 // pred_check
    _
  $region63: #{discriminator_forward.3} parent=0 // pred_check_branch
    %671 = sbr.rel (0) target = $region65
  $region64: #{discriminator_forward.3} parent=0 // pred_region
    _
  $region65: #{discriminator_forward.3} parent=0 // pred_fallthru
    _
  // Predicated region
  $region66: #{discriminator_forward.3} parent=0 // pred_check
    _
  $region67: #{discriminator_forward.3} parent=0 // pred_check_branch
    %673 = sbr.rel (0) target = $region69
  $region68: #{discriminator_forward.3} parent=0 // pred_region
    _
  $region69: #{discriminator_forward.3} parent=0 // pred_fallthru
    _

</llo_original>
